<compile_context>
chip_gen: v5e
topology: v5e:2x2
jax: 0.10.0
libtpu: 0.0.40
codegen_flags: <defaults>
</compile_context>

<pallas_src>
import jax
import jax.numpy as jnp
from jax.experimental import pallas as pl
from jax.experimental.pallas import tpu as pltpu


def _round_up(n, m):
    return ((n + m - 1) // m) * m


def linear_model_kernel(w1_ref, b1_ref, w2_ref, x_ref, o_ref):
    # w1_ref: (3, 9) f32 SMEM   (PyTorch Linear(9,3).weight layout: (out, in))
    # b1_ref: (3,)   f32 SMEM
    # w2_ref: (2, 3) f32 SMEM   (PyTorch Linear(3,2).weight layout)
    # x_ref : (9, tc, 128) f32 VMEM   -- batch on (sublane-chunk, lane)
    # o_ref : (2, tc, 128) f32 VMEM
    x = x_ref[...]                                    # (9, tc, 128)

    # ---- Layer 1: h_j = relu(sum_k w1[j,k] * x[k] + b1[j]) -------------------
    # Dense (tc, 128) vregs; scalar weights read from SMEM, broadcast on the VPU.
    h = []
    for j in range(3):
        acc = w1_ref[j, 0] * x[0]
        for k in range(1, 9):
            acc = acc + w1_ref[j, k] * x[k]
        h.append(jnp.maximum(acc + b1_ref[j], 0.0))

    # ---- Layer 2 (no bias) folded into the 2-class softmax -------------------
    # d = y0 - y1 = (w2[0,:] - w2[1,:]) . h ;  p0 = sigmoid(d), p1 = 1 - p0.
    v0 = w2_ref[0, 0] - w2_ref[1, 0]
    v1 = w2_ref[0, 1] - w2_ref[1, 1]
    v2 = w2_ref[0, 2] - w2_ref[1, 2]
    d = v0 * h[0] + v1 * h[1] + v2 * h[2]             # (tc, 128)
    p0 = 1.0 / (1.0 + jnp.exp(-d))                    # EUP exp + exact divide

    # Direct lane-dense row stores (no concatenate / relayout temp).
    o_ref[0] = p0
    o_ref[1] = 1.0 - p0


def linear_model_forward(x, w1, b1, w2, *, block_b=65536):
    """x: (B, 9); w1: (3, 9); b1: (3,); w2: (2, 3)  ->  (B, 2) f32 softmax probs.

    Weights are in native PyTorch (out_features, in_features) layout.
    block_b: batch tile size in elements, must be a multiple of 1024.
    """
    assert block_b % 1024 == 0
    B, d_in = x.shape
    assert d_in == 9

    if x.dtype != jnp.float32:
        # TODO(synk): for bf16 inputs, keep them bf16 through the DMA and upcast
        # in-kernel to halve input HBM traffic; f32 inputs take this no-copy path.
        x = x.astype(jnp.float32)

    # Batch onto the lane axis; pad only to the next multiple of 128 lanes.
    c = -(-B // 128)                       # number of 128-lane batch chunks
    bp = c * 128
    xt = x.T                               # (9, B): the one relayout copy we keep
    if bp != B:
        xt = jnp.pad(xt, ((0, 0), (0, bp - B)))
    x3 = xt.reshape(9, c, 128)             # minor-dim split -> cheap reshape

    # ---- Batch tile selection ------------------------------------------------
    # Block's second-to-last dim must be a multiple of 8 or equal the full extent.
    tc_max = block_b // 128
    if c <= tc_max:
        if c >= 16:
            # Split into ~2 tiles so the "parallel" axis can use both v7x cores.
            tc = _round_up(-(-c // 2), 8)
        else:
            tc = c                         # single block equal to the full extent
    else:
        tc = tc_max
    steps = -(-c // tc)                    # ragged trailing block is masked by Pallas

    out3 = pl.pallas_call(
        linear_model_kernel,
        out_shape=jax.ShapeDtypeStruct((2, c, 128), jnp.float32),
        grid=(steps,),
        in_specs=[
            # Weights / bias: whole-array, SMEM-resident across all grid steps.
            pl.BlockSpec(memory_space=pltpu.MemorySpace.SMEM),    # w1 (3, 9)
            pl.BlockSpec(memory_space=pltpu.MemorySpace.SMEM),    # b1 (3,)
            pl.BlockSpec(memory_space=pltpu.MemorySpace.SMEM),    # w2 (2, 3)
            # Activations: dense 3-D blocks, batch on (sublane, lane).
            pl.BlockSpec((9, tc, 128), lambda i: (0, i, 0)),      # x3 (9, c, 128)
        ],
        out_specs=pl.BlockSpec((2, tc, 128), lambda i: (0, i, 0)),
        compiler_params=pltpu.CompilerParams(
            dimension_semantics=("parallel",),    # shards steps across v7x's 2 TCs
        ),
    )(w1.astype(jnp.float32), b1.astype(jnp.float32), w2.astype(jnp.float32), x3)

    # Back to the module's natural (B, 2) layout (only 8 B/elem of traffic).
    return out3.reshape(2, bp)[:, :B].T


def reference_forward(x, w1, b1, w2):
    h = jnp.maximum(x @ w1.T + b1, 0.0)
    y = h @ w2.T
    return jax.nn.softmax(y, axis=-1)


if __name__ == "__main__":
    key = jax.random.PRNGKey(0)
    k_x, k_w1, k_b1, k_w2, k_x2 = jax.random.split(key, 5)

    D_IN, D_HID, D_OUT = 9, 3, 2

    # PyTorch-style init: U(-1/sqrt(fan_in), +1/sqrt(fan_in)), torch weight layout.
    bound1 = 1.0 / (D_IN ** 0.5)
    bound2 = 1.0 / (D_HID ** 0.5)
    w1 = jax.random.uniform(k_w1, (D_HID, D_IN), jnp.float32, -bound1, bound1)
    b1 = jax.random.uniform(k_b1, (D_HID,), jnp.float32, -bound1, bound1)
    w2 = jax.random.uniform(k_w2, (D_OUT, D_HID), jnp.float32, -bound2, bound2)

    fwd = jax.jit(linear_model_forward, static_argnames=("block_b",))

    # Small batch (single grid step, one padded 128-lane chunk).
    x_small = jax.random.normal(k_x, (8, D_IN), jnp.float32)
    out_small = jax.block_until_ready(fwd(x_small, w1, b1, w2))
    ref_small = reference_forward(x_small, w1, b1, w2)
    assert out_small.shape == (8, D_OUT)
    assert jnp.allclose(out_small, ref_small, atol=1e-5, rtol=1e-5), \
        "mismatch vs reference (small batch)"

    # Larger batch: multi-step grid, ragged trailing block, padded lanes.
    x_big = jax.random.normal(k_x2, (2100, D_IN), jnp.float32)
    out_big = jax.block_until_ready(fwd(x_big, w1, b1, w2))
    ref_big = reference_forward(x_big, w1, b1, w2)
    assert out_big.shape == (2100, D_OUT)
    assert jnp.allclose(out_big, ref_big, atol=1e-5, rtol=1e-5), \
        "mismatch vs reference (tiled batch)"

    print("KERNEL_OK")
</pallas_src>

<mosaic_0001>
module attributes {stable_mosaic.version = 11 : i64} {
  func.func @linear_model_kernel(%arg0: i32, %arg1: memref<3x9xf32, #tpu.memory_space<smem>>, %arg2: memref<3xf32, #tpu.memory_space<smem>>, %arg3: memref<2x3xf32, #tpu.memory_space<smem>>, %arg4: memref<9x1x128xf32, #tpu.memory_space<vmem>>, %arg5: memref<2x1x128xf32, #tpu.memory_space<vmem>>) attributes {dimension_semantics = [#tpu.dimension_semantics<parallel>], iteration_bounds = array<i64: 1>, scalar_prefetch = 0 : i64, scratch_operands = 0 : i64, tpu.core_type = #tpu.core_type<tc>, window_params = [{transform_indices = @transform_0, window_bounds = array<i64: 3, 9>}, {transform_indices = @transform_1, window_bounds = array<i64: 3>}, {transform_indices = @transform_2, window_bounds = array<i64: 2, 3>}, {transform_indices = @transform_3, window_bounds = array<i64: 9, 1, 128>}, {transform_indices = @transform_4, window_bounds = array<i64: 2, 1, 128>}]} {
    %c0 = arith.constant 0 : index
    %c0_0 = arith.constant 0 : index
    %c0_1 = arith.constant 0 : index
    %0 = vector.load %arg4[%c0, %c0_0, %c0_1] : memref<9x1x128xf32, #tpu.memory_space<vmem>>, vector<9x1x128xf32>
    %c0_2 = arith.constant 0 : index
    %c0_3 = arith.constant 0 : index
    %1 = memref.load %arg1[%c0_2, %c0_3] : memref<3x9xf32, #tpu.memory_space<smem>>
    %2 = vector.extract_strided_slice %0 {offsets = [0, 0, 0], sizes = [1, 1, 128], strides = [1, 1, 1]} : vector<9x1x128xf32> to vector<1x1x128xf32>
    %3 = vector.shape_cast %2 : vector<1x1x128xf32> to vector<1x128xf32>
    %4 = vector.broadcast %1 : f32 to vector<1x128xf32>
    %5 = arith.mulf %4, %3 : vector<1x128xf32>
    %c0_4 = arith.constant 0 : index
    %c1 = arith.constant 1 : index
    %6 = memref.load %arg1[%c0_4, %c1] : memref<3x9xf32, #tpu.memory_space<smem>>
    %7 = vector.extract_strided_slice %0 {offsets = [1, 0, 0], sizes = [1, 1, 128], strides = [1, 1, 1]} : vector<9x1x128xf32> to vector<1x1x128xf32>
    %8 = vector.shape_cast %7 : vector<1x1x128xf32> to vector<1x128xf32>
    %9 = vector.broadcast %6 : f32 to vector<1x128xf32>
    %10 = arith.mulf %9, %8 : vector<1x128xf32>
    %11 = arith.addf %5, %10 : vector<1x128xf32>
    %c0_5 = arith.constant 0 : index
    %c2 = arith.constant 2 : index
    %12 = memref.load %arg1[%c0_5, %c2] : memref<3x9xf32, #tpu.memory_space<smem>>
    %13 = vector.extract_strided_slice %0 {offsets = [2, 0, 0], sizes = [1, 1, 128], strides = [1, 1, 1]} : vector<9x1x128xf32> to vector<1x1x128xf32>
    %14 = vector.shape_cast %13 : vector<1x1x128xf32> to vector<1x128xf32>
    %15 = vector.broadcast %12 : f32 to vector<1x128xf32>
    %16 = arith.mulf %15, %14 : vector<1x128xf32>
    %17 = arith.addf %11, %16 : vector<1x128xf32>
    %c0_6 = arith.constant 0 : index
    %c3 = arith.constant 3 : index
    %18 = memref.load %arg1[%c0_6, %c3] : memref<3x9xf32, #tpu.memory_space<smem>>
    %19 = vector.extract_strided_slice %0 {offsets = [3, 0, 0], sizes = [1, 1, 128], strides = [1, 1, 1]} : vector<9x1x128xf32> to vector<1x1x128xf32>
    %20 = vector.shape_cast %19 : vector<1x1x128xf32> to vector<1x128xf32>
    %21 = vector.broadcast %18 : f32 to vector<1x128xf32>
    %22 = arith.mulf %21, %20 : vector<1x128xf32>
    %23 = arith.addf %17, %22 : vector<1x128xf32>
    %c0_7 = arith.constant 0 : index
    %c4 = arith.constant 4 : index
    %24 = memref.load %arg1[%c0_7, %c4] : memref<3x9xf32, #tpu.memory_space<smem>>
    %25 = vector.extract_strided_slice %0 {offsets = [4, 0, 0], sizes = [1, 1, 128], strides = [1, 1, 1]} : vector<9x1x128xf32> to vector<1x1x128xf32>
    %26 = vector.shape_cast %25 : vector<1x1x128xf32> to vector<1x128xf32>
    %27 = vector.broadcast %24 : f32 to vector<1x128xf32>
    %28 = arith.mulf %27, %26 : vector<1x128xf32>
    %29 = arith.addf %23, %28 : vector<1x128xf32>
    %c0_8 = arith.constant 0 : index
    %c5 = arith.constant 5 : index
    %30 = memref.load %arg1[%c0_8, %c5] : memref<3x9xf32, #tpu.memory_space<smem>>
    %31 = vector.extract_strided_slice %0 {offsets = [5, 0, 0], sizes = [1, 1, 128], strides = [1, 1, 1]} : vector<9x1x128xf32> to vector<1x1x128xf32>
    %32 = vector.shape_cast %31 : vector<1x1x128xf32> to vector<1x128xf32>
    %33 = vector.broadcast %30 : f32 to vector<1x128xf32>
    %34 = arith.mulf %33, %32 : vector<1x128xf32>
    %35 = arith.addf %29, %34 : vector<1x128xf32>
    %c0_9 = arith.constant 0 : index
    %c6 = arith.constant 6 : index
    %36 = memref.load %arg1[%c0_9, %c6] : memref<3x9xf32, #tpu.memory_space<smem>>
    %37 = vector.extract_strided_slice %0 {offsets = [6, 0, 0], sizes = [1, 1, 128], strides = [1, 1, 1]} : vector<9x1x128xf32> to vector<1x1x128xf32>
    %38 = vector.shape_cast %37 : vector<1x1x128xf32> to vector<1x128xf32>
    %39 = vector.broadcast %36 : f32 to vector<1x128xf32>
    %40 = arith.mulf %39, %38 : vector<1x128xf32>
    %41 = arith.addf %35, %40 : vector<1x128xf32>
    %c0_10 = arith.constant 0 : index
    %c7 = arith.constant 7 : index
    %42 = memref.load %arg1[%c0_10, %c7] : memref<3x9xf32, #tpu.memory_space<smem>>
    %43 = vector.extract_strided_slice %0 {offsets = [7, 0, 0], sizes = [1, 1, 128], strides = [1, 1, 1]} : vector<9x1x128xf32> to vector<1x1x128xf32>
    %44 = vector.shape_cast %43 : vector<1x1x128xf32> to vector<1x128xf32>
    %45 = vector.broadcast %42 : f32 to vector<1x128xf32>
    %46 = arith.mulf %45, %44 : vector<1x128xf32>
    %47 = arith.addf %41, %46 : vector<1x128xf32>
    %c0_11 = arith.constant 0 : index
    %c8 = arith.constant 8 : index
    %48 = memref.load %arg1[%c0_11, %c8] : memref<3x9xf32, #tpu.memory_space<smem>>
    %49 = vector.extract_strided_slice %0 {offsets = [8, 0, 0], sizes = [1, 1, 128], strides = [1, 1, 1]} : vector<9x1x128xf32> to vector<1x1x128xf32>
    %50 = vector.shape_cast %49 : vector<1x1x128xf32> to vector<1x128xf32>
    %51 = vector.broadcast %48 : f32 to vector<1x128xf32>
    %52 = arith.mulf %51, %50 : vector<1x128xf32>
    %53 = arith.addf %47, %52 : vector<1x128xf32>
    %c0_12 = arith.constant 0 : index
    %54 = memref.load %arg2[%c0_12] : memref<3xf32, #tpu.memory_space<smem>>
    %55 = vector.broadcast %54 : f32 to vector<1x128xf32>
    %56 = arith.addf %53, %55 : vector<1x128xf32>
    %cst = arith.constant 0.000000e+00 : f32
    %57 = vector.broadcast %cst : f32 to vector<1x128xf32>
    %58 = arith.maximumf %56, %57 : vector<1x128xf32>
    %c1_13 = arith.constant 1 : index
    %c0_14 = arith.constant 0 : index
    %59 = memref.load %arg1[%c1_13, %c0_14] : memref<3x9xf32, #tpu.memory_space<smem>>
    %60 = vector.extract_strided_slice %0 {offsets = [0, 0, 0], sizes = [1, 1, 128], strides = [1, 1, 1]} : vector<9x1x128xf32> to vector<1x1x128xf32>
    %61 = vector.shape_cast %60 : vector<1x1x128xf32> to vector<1x128xf32>
    %62 = vector.broadcast %59 : f32 to vector<1x128xf32>
    %63 = arith.mulf %62, %61 : vector<1x128xf32>
    %c1_15 = arith.constant 1 : index
    %c1_16 = arith.constant 1 : index
    %64 = memref.load %arg1[%c1_15, %c1_16] : memref<3x9xf32, #tpu.memory_space<smem>>
    %65 = vector.extract_strided_slice %0 {offsets = [1, 0, 0], sizes = [1, 1, 128], strides = [1, 1, 1]} : vector<9x1x128xf32> to vector<1x1x128xf32>
    %66 = vector.shape_cast %65 : vector<1x1x128xf32> to vector<1x128xf32>
    %67 = vector.broadcast %64 : f32 to vector<1x128xf32>
    %68 = arith.mulf %67, %66 : vector<1x128xf32>
    %69 = arith.addf %63, %68 : vector<1x128xf32>
    %c1_17 = arith.constant 1 : index
    %c2_18 = arith.constant 2 : index
    %70 = memref.load %arg1[%c1_17, %c2_18] : memref<3x9xf32, #tpu.memory_space<smem>>
    %71 = vector.extract_strided_slice %0 {offsets = [2, 0, 0], sizes = [1, 1, 128], strides = [1, 1, 1]} : vector<9x1x128xf32> to vector<1x1x128xf32>
    %72 = vector.shape_cast %71 : vector<1x1x128xf32> to vector<1x128xf32>
    %73 = vector.broadcast %70 : f32 to vector<1x128xf32>
    %74 = arith.mulf %73, %72 : vector<1x128xf32>
    %75 = arith.addf %69, %74 : vector<1x128xf32>
    %c1_19 = arith.constant 1 : index
    %c3_20 = arith.constant 3 : index
    %76 = memref.load %arg1[%c1_19, %c3_20] : memref<3x9xf32, #tpu.memory_space<smem>>
    %77 = vector.extract_strided_slice %0 {offsets = [3, 0, 0], sizes = [1, 1, 128], strides = [1, 1, 1]} : vector<9x1x128xf32> to vector<1x1x128xf32>
    %78 = vector.shape_cast %77 : vector<1x1x128xf32> to vector<1x128xf32>
    %79 = vector.broadcast %76 : f32 to vector<1x128xf32>
    %80 = arith.mulf %79, %78 : vector<1x128xf32>
    %81 = arith.addf %75, %80 : vector<1x128xf32>
    %c1_21 = arith.constant 1 : index
    %c4_22 = arith.constant 4 : index
    %82 = memref.load %arg1[%c1_21, %c4_22] : memref<3x9xf32, #tpu.memory_space<smem>>
    %83 = vector.extract_strided_slice %0 {offsets = [4, 0, 0], sizes = [1, 1, 128], strides = [1, 1, 1]} : vector<9x1x128xf32> to vector<1x1x128xf32>
    %84 = vector.shape_cast %83 : vector<1x1x128xf32> to vector<1x128xf32>
    %85 = vector.broadcast %82 : f32 to vector<1x128xf32>
    %86 = arith.mulf %85, %84 : vector<1x128xf32>
    %87 = arith.addf %81, %86 : vector<1x128xf32>
    %c1_23 = arith.constant 1 : index
    %c5_24 = arith.constant 5 : index
    %88 = memref.load %arg1[%c1_23, %c5_24] : memref<3x9xf32, #tpu.memory_space<smem>>
    %89 = vector.extract_strided_slice %0 {offsets = [5, 0, 0], sizes = [1, 1, 128], strides = [1, 1, 1]} : vector<9x1x128xf32> to vector<1x1x128xf32>
    %90 = vector.shape_cast %89 : vector<1x1x128xf32> to vector<1x128xf32>
    %91 = vector.broadcast %88 : f32 to vector<1x128xf32>
    %92 = arith.mulf %91, %90 : vector<1x128xf32>
    %93 = arith.addf %87, %92 : vector<1x128xf32>
    %c1_25 = arith.constant 1 : index
    %c6_26 = arith.constant 6 : index
    %94 = memref.load %arg1[%c1_25, %c6_26] : memref<3x9xf32, #tpu.memory_space<smem>>
    %95 = vector.extract_strided_slice %0 {offsets = [6, 0, 0], sizes = [1, 1, 128], strides = [1, 1, 1]} : vector<9x1x128xf32> to vector<1x1x128xf32>
    %96 = vector.shape_cast %95 : vector<1x1x128xf32> to vector<1x128xf32>
    %97 = vector.broadcast %94 : f32 to vector<1x128xf32>
    %98 = arith.mulf %97, %96 : vector<1x128xf32>
    %99 = arith.addf %93, %98 : vector<1x128xf32>
    %c1_27 = arith.constant 1 : index
    %c7_28 = arith.constant 7 : index
    %100 = memref.load %arg1[%c1_27, %c7_28] : memref<3x9xf32, #tpu.memory_space<smem>>
    %101 = vector.extract_strided_slice %0 {offsets = [7, 0, 0], sizes = [1, 1, 128], strides = [1, 1, 1]} : vector<9x1x128xf32> to vector<1x1x128xf32>
    %102 = vector.shape_cast %101 : vector<1x1x128xf32> to vector<1x128xf32>
    %103 = vector.broadcast %100 : f32 to vector<1x128xf32>
    %104 = arith.mulf %103, %102 : vector<1x128xf32>
    %105 = arith.addf %99, %104 : vector<1x128xf32>
    %c1_29 = arith.constant 1 : index
    %c8_30 = arith.constant 8 : index
    %106 = memref.load %arg1[%c1_29, %c8_30] : memref<3x9xf32, #tpu.memory_space<smem>>
    %107 = vector.extract_strided_slice %0 {offsets = [8, 0, 0], sizes = [1, 1, 128], strides = [1, 1, 1]} : vector<9x1x128xf32> to vector<1x1x128xf32>
    %108 = vector.shape_cast %107 : vector<1x1x128xf32> to vector<1x128xf32>
    %109 = vector.broadcast %106 : f32 to vector<1x128xf32>
    %110 = arith.mulf %109, %108 : vector<1x128xf32>
    %111 = arith.addf %105, %110 : vector<1x128xf32>
    %c1_31 = arith.constant 1 : index
    %112 = memref.load %arg2[%c1_31] : memref<3xf32, #tpu.memory_space<smem>>
    %113 = vector.broadcast %112 : f32 to vector<1x128xf32>
    %114 = arith.addf %111, %113 : vector<1x128xf32>
    %cst_32 = arith.constant 0.000000e+00 : f32
    %115 = vector.broadcast %cst_32 : f32 to vector<1x128xf32>
    %116 = arith.maximumf %114, %115 : vector<1x128xf32>
    %c2_33 = arith.constant 2 : index
    %c0_34 = arith.constant 0 : index
    %117 = memref.load %arg1[%c2_33, %c0_34] : memref<3x9xf32, #tpu.memory_space<smem>>
    %118 = vector.extract_strided_slice %0 {offsets = [0, 0, 0], sizes = [1, 1, 128], strides = [1, 1, 1]} : vector<9x1x128xf32> to vector<1x1x128xf32>
    %119 = vector.shape_cast %118 : vector<1x1x128xf32> to vector<1x128xf32>
    %120 = vector.broadcast %117 : f32 to vector<1x128xf32>
    %121 = arith.mulf %120, %119 : vector<1x128xf32>
    %c2_35 = arith.constant 2 : index
    %c1_36 = arith.constant 1 : index
    %122 = memref.load %arg1[%c2_35, %c1_36] : memref<3x9xf32, #tpu.memory_space<smem>>
    %123 = vector.extract_strided_slice %0 {offsets = [1, 0, 0], sizes = [1, 1, 128], strides = [1, 1, 1]} : vector<9x1x128xf32> to vector<1x1x128xf32>
    %124 = vector.shape_cast %123 : vector<1x1x128xf32> to vector<1x128xf32>
    %125 = vector.broadcast %122 : f32 to vector<1x128xf32>
    %126 = arith.mulf %125, %124 : vector<1x128xf32>
    %127 = arith.addf %121, %126 : vector<1x128xf32>
    %c2_37 = arith.constant 2 : index
    %c2_38 = arith.constant 2 : index
    %128 = memref.load %arg1[%c2_37, %c2_38] : memref<3x9xf32, #tpu.memory_space<smem>>
    %129 = vector.extract_strided_slice %0 {offsets = [2, 0, 0], sizes = [1, 1, 128], strides = [1, 1, 1]} : vector<9x1x128xf32> to vector<1x1x128xf32>
    %130 = vector.shape_cast %129 : vector<1x1x128xf32> to vector<1x128xf32>
    %131 = vector.broadcast %128 : f32 to vector<1x128xf32>
    %132 = arith.mulf %131, %130 : vector<1x128xf32>
    %133 = arith.addf %127, %132 : vector<1x128xf32>
    %c2_39 = arith.constant 2 : index
    %c3_40 = arith.constant 3 : index
    %134 = memref.load %arg1[%c2_39, %c3_40] : memref<3x9xf32, #tpu.memory_space<smem>>
    %135 = vector.extract_strided_slice %0 {offsets = [3, 0, 0], sizes = [1, 1, 128], strides = [1, 1, 1]} : vector<9x1x128xf32> to vector<1x1x128xf32>
    %136 = vector.shape_cast %135 : vector<1x1x128xf32> to vector<1x128xf32>
    %137 = vector.broadcast %134 : f32 to vector<1x128xf32>
    %138 = arith.mulf %137, %136 : vector<1x128xf32>
    %139 = arith.addf %133, %138 : vector<1x128xf32>
    %c2_41 = arith.constant 2 : index
    %c4_42 = arith.constant 4 : index
    %140 = memref.load %arg1[%c2_41, %c4_42] : memref<3x9xf32, #tpu.memory_space<smem>>
    %141 = vector.extract_strided_slice %0 {offsets = [4, 0, 0], sizes = [1, 1, 128], strides = [1, 1, 1]} : vector<9x1x128xf32> to vector<1x1x128xf32>
    %142 = vector.shape_cast %141 : vector<1x1x128xf32> to vector<1x128xf32>
    %143 = vector.broadcast %140 : f32 to vector<1x128xf32>
    %144 = arith.mulf %143, %142 : vector<1x128xf32>
    %145 = arith.addf %139, %144 : vector<1x128xf32>
    %c2_43 = arith.constant 2 : index
    %c5_44 = arith.constant 5 : index
    %146 = memref.load %arg1[%c2_43, %c5_44] : memref<3x9xf32, #tpu.memory_space<smem>>
    %147 = vector.extract_strided_slice %0 {offsets = [5, 0, 0], sizes = [1, 1, 128], strides = [1, 1, 1]} : vector<9x1x128xf32> to vector<1x1x128xf32>
    %148 = vector.shape_cast %147 : vector<1x1x128xf32> to vector<1x128xf32>
    %149 = vector.broadcast %146 : f32 to vector<1x128xf32>
    %150 = arith.mulf %149, %148 : vector<1x128xf32>
    %151 = arith.addf %145, %150 : vector<1x128xf32>
    %c2_45 = arith.constant 2 : index
    %c6_46 = arith.constant 6 : index
    %152 = memref.load %arg1[%c2_45, %c6_46] : memref<3x9xf32, #tpu.memory_space<smem>>
    %153 = vector.extract_strided_slice %0 {offsets = [6, 0, 0], sizes = [1, 1, 128], strides = [1, 1, 1]} : vector<9x1x128xf32> to vector<1x1x128xf32>
    %154 = vector.shape_cast %153 : vector<1x1x128xf32> to vector<1x128xf32>
    %155 = vector.broadcast %152 : f32 to vector<1x128xf32>
    %156 = arith.mulf %155, %154 : vector<1x128xf32>
    %157 = arith.addf %151, %156 : vector<1x128xf32>
    %c2_47 = arith.constant 2 : index
    %c7_48 = arith.constant 7 : index
    %158 = memref.load %arg1[%c2_47, %c7_48] : memref<3x9xf32, #tpu.memory_space<smem>>
    %159 = vector.extract_strided_slice %0 {offsets = [7, 0, 0], sizes = [1, 1, 128], strides = [1, 1, 1]} : vector<9x1x128xf32> to vector<1x1x128xf32>
    %160 = vector.shape_cast %159 : vector<1x1x128xf32> to vector<1x128xf32>
    %161 = vector.broadcast %158 : f32 to vector<1x128xf32>
    %162 = arith.mulf %161, %160 : vector<1x128xf32>
    %163 = arith.addf %157, %162 : vector<1x128xf32>
    %c2_49 = arith.constant 2 : index
    %c8_50 = arith.constant 8 : index
    %164 = memref.load %arg1[%c2_49, %c8_50] : memref<3x9xf32, #tpu.memory_space<smem>>
    %165 = vector.extract_strided_slice %0 {offsets = [8, 0, 0], sizes = [1, 1, 128], strides = [1, 1, 1]} : vector<9x1x128xf32> to vector<1x1x128xf32>
    %166 = vector.shape_cast %165 : vector<1x1x128xf32> to vector<1x128xf32>
    %167 = vector.broadcast %164 : f32 to vector<1x128xf32>
    %168 = arith.mulf %167, %166 : vector<1x128xf32>
    %169 = arith.addf %163, %168 : vector<1x128xf32>
    %c2_51 = arith.constant 2 : index
    %170 = memref.load %arg2[%c2_51] : memref<3xf32, #tpu.memory_space<smem>>
    %171 = vector.broadcast %170 : f32 to vector<1x128xf32>
    %172 = arith.addf %169, %171 : vector<1x128xf32>
    %cst_52 = arith.constant 0.000000e+00 : f32
    %173 = vector.broadcast %cst_52 : f32 to vector<1x128xf32>
    %174 = arith.maximumf %172, %173 : vector<1x128xf32>
    %c0_53 = arith.constant 0 : index
    %c0_54 = arith.constant 0 : index
    %175 = memref.load %arg3[%c0_53, %c0_54] : memref<2x3xf32, #tpu.memory_space<smem>>
    %c1_55 = arith.constant 1 : index
    %c0_56 = arith.constant 0 : index
    %176 = memref.load %arg3[%c1_55, %c0_56] : memref<2x3xf32, #tpu.memory_space<smem>>
    %177 = arith.subf %175, %176 : f32
    %c0_57 = arith.constant 0 : index
    %c1_58 = arith.constant 1 : index
    %178 = memref.load %arg3[%c0_57, %c1_58] : memref<2x3xf32, #tpu.memory_space<smem>>
    %c1_59 = arith.constant 1 : index
    %c1_60 = arith.constant 1 : index
    %179 = memref.load %arg3[%c1_59, %c1_60] : memref<2x3xf32, #tpu.memory_space<smem>>
    %180 = arith.subf %178, %179 : f32
    %c0_61 = arith.constant 0 : index
    %c2_62 = arith.constant 2 : index
    %181 = memref.load %arg3[%c0_61, %c2_62] : memref<2x3xf32, #tpu.memory_space<smem>>
    %c1_63 = arith.constant 1 : index
    %c2_64 = arith.constant 2 : index
    %182 = memref.load %arg3[%c1_63, %c2_64] : memref<2x3xf32, #tpu.memory_space<smem>>
    %183 = arith.subf %181, %182 : f32
    %184 = vector.broadcast %177 : f32 to vector<1x128xf32>
    %185 = arith.mulf %184, %58 : vector<1x128xf32>
    %186 = vector.broadcast %180 : f32 to vector<1x128xf32>
    %187 = arith.mulf %186, %116 : vector<1x128xf32>
    %188 = arith.addf %185, %187 : vector<1x128xf32>
    %189 = vector.broadcast %183 : f32 to vector<1x128xf32>
    %190 = arith.mulf %189, %174 : vector<1x128xf32>
    %191 = arith.addf %188, %190 : vector<1x128xf32>
    %cst_65 = arith.constant 0.000000e+00 : f32
    %192 = vector.broadcast %cst_65 : f32 to vector<1x128xf32>
    %193 = arith.subf %192, %191 : vector<1x128xf32>
    %194 = math.exp %193 : vector<1x128xf32>
    %cst_66 = arith.constant 1.000000e+00 : f32
    %195 = vector.broadcast %cst_66 : f32 to vector<1x128xf32>
    %196 = arith.addf %195, %194 : vector<1x128xf32>
    %cst_67 = arith.constant 1.000000e+00 : f32
    %197 = vector.broadcast %cst_67 : f32 to vector<1x128xf32>
    %198 = arith.divf %197, %196 : vector<1x128xf32>
    %c0_68 = arith.constant 0 : index
    %c0_69 = arith.constant 0 : index
    %c0_70 = arith.constant 0 : index
    %199 = vector.load %arg5[%c0_68, %c0_69, %c0_70] : memref<2x1x128xf32, #tpu.memory_space<vmem>>, vector<1x1x128xf32>
    %200 = vector.shape_cast %199 : vector<1x1x128xf32> to vector<1x128xf32>
    %201 = vector.shape_cast %198 : vector<1x128xf32> to vector<1x1x128xf32>
    tpu.vector_store %arg5[%c0_68, %c0_69, %c0_70], %201 {strides = array<i32>} : memref<2x1x128xf32, #tpu.memory_space<vmem>>, vector<1x1x128xf32>,
    %cst_71 = arith.constant 1.000000e+00 : f32
    %202 = vector.broadcast %cst_71 : f32 to vector<1x128xf32>
    %203 = arith.subf %202, %198 : vector<1x128xf32>
    %c1_72 = arith.constant 1 : index
    %c0_73 = arith.constant 0 : index
    %c0_74 = arith.constant 0 : index
    %204 = vector.load %arg5[%c1_72, %c0_73, %c0_74] : memref<2x1x128xf32, #tpu.memory_space<vmem>>, vector<1x1x128xf32>
    %205 = vector.shape_cast %204 : vector<1x1x128xf32> to vector<1x128xf32>
    %206 = vector.shape_cast %203 : vector<1x128xf32> to vector<1x1x128xf32>
    tpu.vector_store %arg5[%c1_72, %c0_73, %c0_74], %206 {strides = array<i32>} : memref<2x1x128xf32, #tpu.memory_space<vmem>>, vector<1x1x128xf32>,
    return
  }
  func.func @transform_0(%arg0: i32) -> (i32, i32) {
    %c0_i32 = arith.constant 0 : i32
    %c0_i32_0 = arith.constant 0 : i32
    %c0_i32_1 = arith.constant 0 : i32
    return %c0_i32, %c0_i32_0 : i32, i32
  }
  func.func @transform_1(%arg0: i32) -> i32 {
    %c0_i32 = arith.constant 0 : i32
    %c0_i32_0 = arith.constant 0 : i32
    return %c0_i32 : i32
  }
  func.func @transform_2(%arg0: i32) -> (i32, i32) {
    %c0_i32 = arith.constant 0 : i32
    %c0_i32_0 = arith.constant 0 : i32
    %c0_i32_1 = arith.constant 0 : i32
    return %c0_i32, %c0_i32_0 : i32, i32
  }
  func.func @transform_3(%arg0: i32) -> (i32, i32, i32) {
    %c0_i32 = arith.constant 0 : i32
    %c0_i32_0 = arith.constant 0 : i32
    %c0_i32_1 = arith.constant 0 : i32
    return %c0_i32, %arg0, %c0_i32_0 : i32, i32, i32
  }
  func.func @transform_4(%arg0: i32) -> (i32, i32, i32) {
    %c0_i32 = arith.constant 0 : i32
    %c0_i32_0 = arith.constant 0 : i32
    %c0_i32_1 = arith.constant 0 : i32
    return %c0_i32, %arg0, %c0_i32_0 : i32, i32, i32
  }
}

</mosaic_0001>

<llo_original>
// kernel: linear_model_forward.1
$region0: #{linear_model_forward.1}
  #allocation0 [shape = 'u32[]', space=smem, size = 0x4, offset = 0x4, fixed_abs, tag = 'smem constant byte address 0x4 - core index']
  #allocation1 [shape = 'u32[72,128]{1,0:T(1,128)}', space=vmem, size = 0x9000, scoped, tag = 'internal scratch']
  %s0 = inlined_call_operand.vmem [shape: f32[3,9], index: 0, kind: input, shape index: {}]
  %s1 = inlined_call_operand.vmem [shape: f32[3], index: 1, kind: input, shape index: {}]
  %s2 = inlined_call_operand.vmem [shape: f32[2,3], index: 2, kind: input, shape index: {}]
  %s3 = inlined_call_operand.vmem [shape: f32[9,1,128], index: 3, kind: input, shape index: {}]
  %s4 = inlined_call_operand.vmem [shape: f32[2,1,128], index: 4, kind: output, shape index: {}]
  %s5 = sld [smem:[#allocation0]]
  $region38: #{linear_model_forward.1} parent=0
    _
  %s7 = ssub.s32 1, %s5
  %s8 = scalar_select 0, %s7, %s5
  $region1: #{linear_model_forward.1} parent=0
    #allocation2 [shape = 'u8[2048]{0}', space=smem, size = 0x800, scoped, tag = 'input window, operand 0, single buffered']
    #allocation3 [shape = 's32[1]{0}', space=sflag, size = 0x4, scoped, tag = 'scoped memory for linear_model_forward.1']
    #allocation4 [shape = 'u8[512]{0}', space=smem, size = 0x200, scoped, tag = 'input window, operand 1, single buffered']
    #allocation5 [shape = 's32[1]{0}', space=sflag, size = 0x4, scoped, tag = 'scoped memory for linear_model_forward.1']
    #allocation6 [shape = 'u8[1024]{0}', space=smem, size = 0x400, scoped, tag = 'input window, operand 2, single buffered']
    %9 = vsyncpa [#allocation3], 0
    %10 = vsyncpa [#allocation5], 0
    // Predicated region
    $region2: #{linear_model_forward.1} parent=1 // pred_check
      _
    $region3: #{linear_model_forward.1} parent=1 // pred_check_branch
      %12 = sbr.rel (0) target = $region5
    $region4: #{linear_model_forward.1} parent=1 // pred_region
      %14 = vsyncadd [#allocation3], 0
      %s16 = sshll.u32 %s0, 4
      %s17 = int_to_ptr.vmem [resolvable:$true] %s16
      %19 = dma.vmem_to_smem %s17, 64, [#allocation2], [#allocation3]
    $region5: #{linear_model_forward.1} parent=1 // pred_fallthru
      _
    // Predicated region
    $region6: #{linear_model_forward.1} parent=1 // pred_check
      _
    $region7: #{linear_model_forward.1} parent=1 // pred_check_branch
      %21 = sbr.rel (0) target = $region9
    $region8: #{linear_model_forward.1} parent=1 // pred_region
      %23 = vsyncadd [#allocation5], 0
      %s25 = sshll.u32 %s1, 4
      %s26 = int_to_ptr.vmem [resolvable:$true] %s25
      %28 = dma.vmem_to_smem %s26, 16, [#allocation4], [#allocation5]
    $region9: #{linear_model_forward.1} parent=1 // pred_fallthru
      _
    // Predicated region
    $region10: #{linear_model_forward.1} parent=1 // pred_check
      _
    $region11: #{linear_model_forward.1} parent=1 // pred_check_branch
      %30 = sbr.rel (0) target = $region13
    $region12: #{linear_model_forward.1} parent=1 // pred_region
      %32 = vsyncadd [#allocation5], 0
      %s34 = sshll.u32 %s2, 4
      %s35 = int_to_ptr.vmem [resolvable:$true] %s34
      %37 = dma.vmem_to_smem %s35, 32, [#allocation6], [#allocation5]
    $region13: #{linear_model_forward.1} parent=1 // pred_fallthru
      _
    // Predicated region
    $region14: #{linear_model_forward.1} parent=1 // pred_check
      _
    $region15: #{linear_model_forward.1} parent=1 // pred_check_branch
      %39 = sbr.rel (0) target = $region17
    $region16: #{linear_model_forward.1} parent=1 // pred_region
      _
    $region17: #{linear_model_forward.1} parent=1 // pred_fallthru
      _
    // Predicated region
    $region18: #{linear_model_forward.1} parent=1 // pred_check
      _
    $region19: #{linear_model_forward.1} parent=1 // pred_check_branch
      %41 = sbr.rel (0) target = $region21
    $region20: #{linear_model_forward.1} parent=1 // pred_region
      %43 = dma.done [#allocation3], 64
    $region21: #{linear_model_forward.1} parent=1 // pred_fallthru
      _
    // Predicated region
    $region22: #{linear_model_forward.1} parent=1 // pred_check
      _
    $region23: #{linear_model_forward.1} parent=1 // pred_check_branch
      %45 = sbr.rel (0) target = $region25
    $region24: #{linear_model_forward.1} parent=1 // pred_region
      %47 = dma.done [#allocation5], 16
    $region25: #{linear_model_forward.1} parent=1 // pred_fallthru
      _
    // Predicated region
    $region26: #{linear_model_forward.1} parent=1 // pred_check
      _
    $region27: #{linear_model_forward.1} parent=1 // pred_check_branch
      %49 = sbr.rel (0) target = $region29
    $region28: #{linear_model_forward.1} parent=1 // pred_region
      %51 = dma.done [#allocation5], 32
    $region29: #{linear_model_forward.1} parent=1 // pred_fallthru
      _
    %52 = sfence
    %v53 = vld [vmem:[%s3] sm:$0x1]
    %v54 = vld [vmem:[%s3 + $0x1] sm:$0x1]
    %v55 = vld [vmem:[%s3 + $0x2] sm:$0x1]
    %v56 = vld [vmem:[%s3 + $0x3] sm:$0x1]
    %v57 = vld [vmem:[%s3 + $0x4] sm:$0x1]
    %v58 = vld [vmem:[%s3 + $0x5] sm:$0x1]
    %v59 = vld [vmem:[%s3 + $0x6] sm:$0x1]
    %v60 = vld [vmem:[%s3 + $0x7] sm:$0x1]
    %v61 = vld [vmem:[%s3 + $0x8] sm:$0x1]
    %s62 = sld [smem:[#allocation2]]
    %v63 = vstv %s62
    %v64 = vmul.f32 %v63, %v53
    %s65 = sld [smem:[#allocation2 + $0x1]]
    %v66 = vstv %s65
    %v67 = vmul.f32 %v66, %v54
    %v68 = vadd.f32 %v64, %v67
    %s69 = sld [smem:[#allocation2 + $0x2]]
    %v70 = vstv %s69
    %v71 = vmul.f32 %v70, %v55
    %v72 = vadd.f32 %v68, %v71
    %s73 = sld [smem:[#allocation2 + $0x3]]
    %v74 = vstv %s73
    %v75 = vmul.f32 %v74, %v56
    %v76 = vadd.f32 %v72, %v75
    %s77 = sld [smem:[#allocation2 + $0x4]]
    %v78 = vstv %s77
    %v79 = vmul.f32 %v78, %v57
    %v80 = vadd.f32 %v76, %v79
    %s81 = sld [smem:[#allocation2 + $0x5]]
    %v82 = vstv %s81
    %v83 = vmul.f32 %v82, %v58
    %v84 = vadd.f32 %v80, %v83
    %s85 = sld [smem:[#allocation2 + $0x6]]
    %v86 = vstv %s85
    %v87 = vmul.f32 %v86, %v59
    %v88 = vadd.f32 %v84, %v87
    %s89 = sld [smem:[#allocation2 + $0x7]]
    %v90 = vstv %s89
    %v91 = vmul.f32 %v90, %v60
    %v92 = vadd.f32 %v88, %v91
    %s93 = sld [smem:[#allocation2 + $0x8]]
    %v94 = vstv %s93
    %v95 = vmul.f32 %v94, %v61
    %v96 = vadd.f32 %v92, %v95
    %s97 = sld [smem:[#allocation4]]
    %v98 = vstv %s97
    %v99 = vadd.f32 %v96, %v98
    %v100 = vmax.f32 %v99, 0.0
    %s101 = sld [smem:[#allocation2 + $0x80]]
    %v102 = vstv %s101
    %v103 = vmul.f32 %v102, %v53
    %s104 = sld [smem:[#allocation2 + $0x81]]
    %v105 = vstv %s104
    %v106 = vmul.f32 %v105, %v54
    %v107 = vadd.f32 %v103, %v106
    %s108 = sld [smem:[#allocation2 + $0x82]]
    %v109 = vstv %s108
    %v110 = vmul.f32 %v109, %v55
    %v111 = vadd.f32 %v107, %v110
    %s112 = sld [smem:[#allocation2 + $0x83]]
    %v113 = vstv %s112
    %v114 = vmul.f32 %v113, %v56
    %v115 = vadd.f32 %v111, %v114
    %s116 = sld [smem:[#allocation2 + $0x84]]
    %v117 = vstv %s116
    %v118 = vmul.f32 %v117, %v57
    %v119 = vadd.f32 %v115, %v118
    %s120 = sld [smem:[#allocation2 + $0x85]]
    %v121 = vstv %s120
    %v122 = vmul.f32 %v121, %v58
    %v123 = vadd.f32 %v119, %v122
    %s124 = sld [smem:[#allocation2 + $0x86]]
    %v125 = vstv %s124
    %v126 = vmul.f32 %v125, %v59
    %v127 = vadd.f32 %v123, %v126
    %s128 = sld [smem:[#allocation2 + $0x87]]
    %v129 = vstv %s128
    %v130 = vmul.f32 %v129, %v60
    %v131 = vadd.f32 %v127, %v130
    %s132 = sld [smem:[#allocation2 + $0x88]]
    %v133 = vstv %s132
    %v134 = vmul.f32 %v133, %v61
    %v135 = vadd.f32 %v131, %v134
    %s136 = sld [smem:[#allocation4 + $0x1]]
    %v137 = vstv %s136
    %v138 = vadd.f32 %v135, %v137
    %v139 = vmax.f32 %v138, 0.0
    %s140 = sld [smem:[#allocation2 + $0x100]]
    %v141 = vstv %s140
    %v142 = vmul.f32 %v141, %v53
    %s143 = sld [smem:[#allocation2 + $0x101]]
    %v144 = vstv %s143
    %v145 = vmul.f32 %v144, %v54
    %v146 = vadd.f32 %v142, %v145
    %s147 = sld [smem:[#allocation2 + $0x102]]
    %v148 = vstv %s147
    %v149 = vmul.f32 %v148, %v55
    %v150 = vadd.f32 %v146, %v149
    %s151 = sld [smem:[#allocation2 + $0x103]]
    %v152 = vstv %s151
    %v153 = vmul.f32 %v152, %v56
    %v154 = vadd.f32 %v150, %v153
    %s155 = sld [smem:[#allocation2 + $0x104]]
    %v156 = vstv %s155
    %v157 = vmul.f32 %v156, %v57
    %v158 = vadd.f32 %v154, %v157
    %s159 = sld [smem:[#allocation2 + $0x105]]
    %v160 = vstv %s159
    %v161 = vmul.f32 %v160, %v58
    %v162 = vadd.f32 %v158, %v161
    %s163 = sld [smem:[#allocation2 + $0x106]]
    %v164 = vstv %s163
    %v165 = vmul.f32 %v164, %v59
    %v166 = vadd.f32 %v162, %v165
    %s167 = sld [smem:[#allocation2 + $0x107]]
    %v168 = vstv %s167
    %v169 = vmul.f32 %v168, %v60
    %v170 = vadd.f32 %v166, %v169
    %s171 = sld [smem:[#allocation2 + $0x108]]
    %v172 = vstv %s171
    %v173 = vmul.f32 %v172, %v61
    %v174 = vadd.f32 %v170, %v173
    %s175 = sld [smem:[#allocation4 + $0x2]]
    %v176 = vstv %s175
    %v177 = vadd.f32 %v174, %v176
    %v178 = vmax.f32 %v177, 0.0
    %s179 = sld [smem:[#allocation6]]
    %s180 = sld [smem:[#allocation6 + $0x80]]
    %s181 = ssub.f32 %s179, %s180
    %s182 = sld [smem:[#allocation6 + $0x1]]
    %s183 = sld [smem:[#allocation6 + $0x81]]
    %s184 = ssub.f32 %s182, %s183
    %s185 = sld [smem:[#allocation6 + $0x2]]
    %s186 = sld [smem:[#allocation6 + $0x82]]
    %s187 = ssub.f32 %s185, %s186
    %v188 = vstv %s181
    %v189 = vmul.f32 %v188, %v100
    %v190 = vstv %s184
    %v191 = vmul.f32 %v190, %v139
    %v192 = vadd.f32 %v189, %v191
    %v193 = vstv %s187
    %v194 = vmul.f32 %v193, %v178
    %v195 = vadd.f32 %v192, %v194
    %v196 = vsub.f32 0.0, %v195
    %v197 = vmul.f32 %v196, 1.442695
    %v198 = vpow.pop %v197
    %v199 = vadd.f32 %v198, 1.0
    %v200 = vrcp.pop %v199
    %v201 = vmul.f32 %v199, %v200
    %v202 = vsub.f32 1.0, %v201
    %v203 = vmul.f32 %v200, %v202
    %v204 = vadd.f32 %v200, %v203
    %vm205 = vweird.f32 %v199
    %vm206 = vweird.f32 %v200
    %vm207 = vmor %vm205, %vm206
    %v208 = vsel %vm207, %v200, %v204
    %v209 = vand.u32 2147483647, %v199
    %vm210 = vcmp.eq.f32.partialorder %v209, 8.507059e+37
    %v211 = vand.u32 %v199, 2147483648
    %v212 = vor.u32 1.1754944e-38, %v211
    %v213 = vsel %vm210, %v212, %v208
    %v214 = vmul.f32 1.0, %v213
    %215 = vst [vmem:[%s4] sm:$0x1] %v214
    %v216 = vsub.f32 1.0, %v214
    %s217 = scalar_lea.vmem %s4, 1
    %218 = vst [vmem:[%s217] sm:$0x1] %v216
    // Predicated region
    $region30: #{linear_model_forward.1} parent=1 // pred_check
      _
    $region31: #{linear_model_forward.1} parent=1 // pred_check_branch
      %220 = sbr.rel (0) target = $region33
    $region32: #{linear_model_forward.1} parent=1 // pred_region
      _
    $region33: #{linear_model_forward.1} parent=1 // pred_fallthru
      _
    // Predicated region
    $region34: #{linear_model_forward.1} parent=1 // pred_check
      _
    $region35: #{linear_model_forward.1} parent=1 // pred_check_branch
      %222 = sbr.rel (0) target = $region37
    $region36: #{linear_model_forward.1} parent=1 // pred_region
      _
    $region37: #{linear_model_forward.1} parent=1 // pred_fallthru
      _
    %223 = vsyncpa [#allocation3], 1
    %224 = vsyncpa [#allocation5], 1

</llo_original>
